<compile_context>
chip_gen: v7x
topology: tpu7x:2x2x1
jax: 0.10.0
libtpu: 0.0.40
codegen_flags: <defaults>
</compile_context>

<pallas_src>
import functools

import jax
import jax.numpy as jnp
from jax import lax
from jax.experimental import pallas as pl
from jax.experimental.pallas import tpu as pltpu


def _focal_loss_kernel(logits_ref, targets_ref, out_ref, *,
                       alpha, gamma, n_valid, tile_rows, masked):
    logits = logits_ref[...].astype(jnp.float32)              # (TN, C)
    tgt = targets_ref[...]                                     # (TN, 1) int32

    # Numerically stable log-sum-exp over classes.
    row_max = jnp.max(logits, axis=-1, keepdims=True)          # (TN, 1)
    shifted = logits - row_max
    lse = row_max + jnp.log(jnp.sum(jnp.exp(shifted), axis=-1, keepdims=True))

    # Gather target-class logit via one-hot compare (no dynamic gather on TPU).
    class_idx = lax.broadcasted_iota(jnp.int32, logits.shape, 1)     # (TN, C)
    logit_t = jnp.sum(jnp.where(class_idx == tgt, logits, 0.0),
                      axis=-1, keepdims=True)                        # (TN, 1)

    # Per-sample cross entropy + focal re-weighting.
    ce = lse - logit_t                                          # (TN, 1)
    pt = jnp.exp(-ce)
    one_minus_pt = 1.0 - pt
    gf = float(gamma)
    if gf.is_integer() and gf >= 0:
        # Integer gamma (default 2.0): plain multiplies, no pow -> no extra EUP work.
        w = jnp.ones_like(one_minus_pt)
        for _ in range(int(gf)):
            w = w * one_minus_pt
    else:
        w = one_minus_pt ** gf
    focal = alpha * w * ce                                      # (TN, 1)

    if masked:
        # Zero rows that are batch padding (branch only emitted when padded).
        row_ids = (pl.program_id(0) * tile_rows
                   + lax.broadcasted_iota(jnp.int32, focal.shape, 0))
        focal = jnp.where(row_ids < n_valid, focal, 0.0)

    partial = jnp.sum(focal)

    # Lane-dense (1, 8, 128) output slab; partial sum lives at [0, 0, 0].
    sub = lax.broadcasted_iota(jnp.int32, (1, 8, 128), 1)
    lane = lax.broadcasted_iota(jnp.int32, (1, 8, 128), 2)
    out_ref[...] = jnp.where((sub == 0) & (lane == 0), partial, 0.0)


def _choose_row_tile(n, c, itemsize):
    # Sublane packing granule: 8 rows (f32), 16 (bf16), 32 (int8/fp8).
    granule = 8 * max(1, 4 // max(itemsize, 1))
    # ~2 MiB of logits per block -> 2x double-buffering stays well under the
    # scoped-VMEM defaults (16 MiB v5e, 32 MiB v6e/v7x).
    target_bytes = 2 * 1024 * 1024
    rows = target_bytes // max(c * itemsize, 1)
    rows = max(granule, min(1024, (rows // granule) * granule))
    if n <= rows:
        return n           # single full-extent block (always a legal block shape)
    return rows            # multiple of the packing granule -> legal sublane tiling


def focal_loss(inputs, targets, alpha=0.25, gamma=2.0, reduction="mean",
               row_tile=None):
    """inputs: (N, C) float logits (f32 or bf16); targets: (N,) int class ids.

    Matches PyTorch FocalLoss.forward for reduction in {'mean', 'sum'}.
    """
    if reduction not in ("mean", "sum"):
        # TODO(synk): reduction='none' (per-sample output) not implemented in the
        # Pallas path; only 'mean' / 'sum' are supported.
        raise NotImplementedError("reduction must be 'mean' or 'sum'")

    n, c = inputs.shape
    itemsize = jnp.dtype(inputs.dtype).itemsize
    tn = int(row_tile) if row_tile is not None else _choose_row_tile(n, c, itemsize)
    num_tiles = -(-n // tn)
    n_pad = num_tiles * tn

    if n_pad != n:
        inputs = jnp.pad(inputs, ((0, n_pad - n), (0, 0)))
        targets = jnp.pad(targets, ((0, n_pad - n),))
    targets_2d = targets.astype(jnp.int32).reshape(n_pad, 1)

    kernel = functools.partial(
        _focal_loss_kernel,
        alpha=float(alpha), gamma=float(gamma),
        n_valid=n, tile_rows=tn, masked=(n_pad != n),
    )

    partials = pl.pallas_call(
        kernel,
        out_shape=jax.ShapeDtypeStruct((num_tiles, 8, 128), jnp.float32),
        grid_spec=pltpu.PrefetchScalarGridSpec(
            num_scalar_prefetch=0,
            grid=(num_tiles,),
            in_specs=[
                pl.BlockSpec((tn, c), lambda i: (i, 0)),
                pl.BlockSpec((tn, 1), lambda i: (i, 0)),
            ],
            out_specs=pl.BlockSpec((1, 8, 128), lambda i: (i, 0, 0)),
        ),
        compiler_params=pltpu.CompilerParams(
            dimension_semantics=("parallel",),
        ),
    )(inputs, targets_2d)

    total = jnp.sum(partials)
    if reduction == "mean":
        return total * jnp.float32(1.0 / n)
    return total


def _focal_loss_ref(inputs, targets, alpha=0.25, gamma=2.0, reduction="mean"):
    # Pure-JAX reference for correctness check.
    logits = inputs.astype(jnp.float32)
    logz = jax.nn.logsumexp(logits, axis=-1)
    logit_t = jnp.take_along_axis(
        logits, targets[:, None].astype(jnp.int32), axis=-1)[:, 0]
    ce = logz - logit_t
    pt = jnp.exp(-ce)
    focal = alpha * (1.0 - pt) ** gamma * ce
    return jnp.mean(focal) if reduction == "mean" else jnp.sum(focal)


if __name__ == "__main__":
    key = jax.random.PRNGKey(0)
    k1, k2, k3, k4 = jax.random.split(key, 4)

    # Small shapes consistent with the module: batch=8 samples, 16 classes.
    N, C = 8, 16
    logits = jax.random.normal(k1, (N, C), dtype=jnp.float32) * 2.0
    targets = jax.random.randint(k2, (N,), 0, C, dtype=jnp.int32)

    # 1) Baseline f32, default tiling, reduction='mean'.
    loss = jax.block_until_ready(focal_loss(logits, targets, alpha=0.25, gamma=2.0))
    ref = _focal_loss_ref(logits, targets, alpha=0.25, gamma=2.0)
    assert jnp.allclose(loss, ref, rtol=1e-5, atol=1e-6), (loss, ref)

    # 2) Tiled + padded + masked path: N=20 with row_tile=8 -> 3 tiles, 4 pad rows.
    N2 = 20
    logits2 = jax.random.normal(k3, (N2, C), dtype=jnp.float32) * 2.0
    targets2 = jax.random.randint(k4, (N2,), 0, C, dtype=jnp.int32)
    loss2 = jax.block_until_ready(focal_loss(logits2, targets2, row_tile=8))
    ref2 = _focal_loss_ref(logits2, targets2)
    assert jnp.allclose(loss2, ref2, rtol=1e-5, atol=1e-6), (loss2, ref2)

    # 3) bf16 logits end-to-end (kernel upcasts internally).
    loss3 = jax.block_until_ready(focal_loss(logits.astype(jnp.bfloat16), targets))
    ref3 = _focal_loss_ref(logits.astype(jnp.bfloat16), targets)
    assert jnp.allclose(loss3, ref3, rtol=1e-3, atol=1e-4), (loss3, ref3)

    # 4) reduction='sum'.
    loss4 = jax.block_until_ready(focal_loss(logits, targets, reduction="sum"))
    ref4 = _focal_loss_ref(logits, targets, reduction="sum")
    assert jnp.allclose(loss4, ref4, rtol=1e-5, atol=1e-6), (loss4, ref4)

    print("KERNEL_OK")
</pallas_src>

<mosaic_0001>
module attributes {stable_mosaic.version = 11 : i64} {
  func.func @_focal_loss_kernel(%arg0: i32, %arg1: memref<8x16xf32, #tpu.memory_space<vmem>>, %arg2: memref<8x1xi32, #tpu.memory_space<vmem>>, %arg3: memref<1x8x128xf32, #tpu.memory_space<vmem>>) attributes {dimension_semantics = [#tpu.dimension_semantics<parallel>], iteration_bounds = array<i64: 1>, scalar_prefetch = 0 : i64, scratch_operands = 0 : i64, tpu.core_type = #tpu.core_type<tc>, window_params = [{transform_indices = @transform_0, window_bounds = array<i64: 8, 16>}, {transform_indices = @transform_1, window_bounds = array<i64: 8, 1>}, {transform_indices = @transform_2, window_bounds = array<i64: 1, 8, 128>}]} {
    %c0 = arith.constant 0 : index
    %c0_0 = arith.constant 0 : index
    %0 = vector.load %arg1[%c0, %c0_0] : memref<8x16xf32, #tpu.memory_space<vmem>>, vector<8x16xf32>
    %c0_1 = arith.constant 0 : index
    %c0_2 = arith.constant 0 : index
    %1 = vector.load %arg2[%c0_1, %c0_2] : memref<8x1xi32, #tpu.memory_space<vmem>>, vector<8x1xi32>
    %cst = arith.constant dense<0xFF800000> : vector<8xf32>
    %2 = vector.multi_reduction <maximumf>, %0, %cst [1] : vector<8x16xf32> to vector<8xf32>
    %3 = vector.shape_cast %2 : vector<8xf32> to vector<8x1xf32>
    %4 = vector.broadcast %3 : vector<8x1xf32> to vector<8x16xf32>
    %5 = arith.subf %0, %4 : vector<8x16xf32>
    %6 = math.exp %5 : vector<8x16xf32>
    %cst_3 = arith.constant dense<0.000000e+00> : vector<8xf32>
    %7 = vector.multi_reduction <add>, %6, %cst_3 [1] : vector<8x16xf32> to vector<8xf32>
    %8 = vector.shape_cast %7 : vector<8xf32> to vector<8x1xf32>
    %9 = math.log %8 : vector<8x1xf32>
    %10 = arith.addf %3, %9 : vector<8x1xf32>
    %11 = tpu.iota {dimensions = array<i32: 1>} : vector<8x16xi32>
    %12 = vector.broadcast %1 : vector<8x1xi32> to vector<8x16xi32>
    %13 = arith.cmpi eq, %11, %12 : vector<8x16xi32>
    %cst_4 = arith.constant 0.000000e+00 : f32
    %14 = vector.broadcast %cst_4 : f32 to vector<8x16xf32>
    %15 = arith.select %13, %0, %14 : vector<8x16xi1>, vector<8x16xf32>
    %cst_5 = arith.constant dense<0.000000e+00> : vector<8xf32>
    %16 = vector.multi_reduction <add>, %15, %cst_5 [1] : vector<8x16xf32> to vector<8xf32>
    %17 = vector.shape_cast %16 : vector<8xf32> to vector<8x1xf32>
    %18 = arith.subf %10, %17 : vector<8x1xf32>
    %cst_6 = arith.constant 0.000000e+00 : f32
    %19 = vector.broadcast %cst_6 : f32 to vector<8x1xf32>
    %20 = arith.subf %19, %18 : vector<8x1xf32>
    %21 = math.exp %20 : vector<8x1xf32>
    %cst_7 = arith.constant 1.000000e+00 : f32
    %22 = vector.broadcast %cst_7 : f32 to vector<8x1xf32>
    %23 = arith.subf %22, %21 : vector<8x1xf32>
    %cst_8 = arith.constant 1.000000e+00 : f32
    %24 = vector.broadcast %cst_8 : f32 to vector<8x1xf32>
    %25 = arith.mulf %24, %23 : vector<8x1xf32>
    %26 = arith.mulf %25, %23 : vector<8x1xf32>
    %cst_9 = arith.constant 2.500000e-01 : f32
    %27 = vector.broadcast %cst_9 : f32 to vector<8x1xf32>
    %28 = arith.mulf %27, %26 : vector<8x1xf32>
    %29 = arith.mulf %28, %18 : vector<8x1xf32>
    %30 = vector.shape_cast %29 : vector<8x1xf32> to vector<1x8x1xf32>
    %cst_10 = arith.constant dense<0.000000e+00> : vector<1xf32>
    %31 = vector.multi_reduction <add>, %30, %cst_10 [1, 2] : vector<1x8x1xf32> to vector<1xf32>
    %32 = vector.shape_cast %31 : vector<1xf32> to vector<1x1x1xf32>
    %33 = vector.extract %32[0, 0, 0] : f32 from vector<1x1x1xf32>
    %34 = tpu.iota {dimensions = array<i32: 1>} : vector<1x8x128xi32>
    %35 = tpu.iota {dimensions = array<i32: 2>} : vector<1x8x128xi32>
    %c0_i32 = arith.constant 0 : i32
    %36 = vector.broadcast %c0_i32 : i32 to vector<1x8x128xi32>
    %37 = arith.cmpi eq, %34, %36 : vector<1x8x128xi32>
    %c0_i32_11 = arith.constant 0 : i32
    %38 = vector.broadcast %c0_i32_11 : i32 to vector<1x8x128xi32>
    %39 = arith.cmpi eq, %35, %38 : vector<1x8x128xi32>
    %40 = arith.andi %37, %39 : vector<1x8x128xi1>
    %cst_12 = arith.constant 0.000000e+00 : f32
    %41 = vector.broadcast %33 : f32 to vector<1x8x128xf32>
    %42 = vector.broadcast %cst_12 : f32 to vector<1x8x128xf32>
    %43 = arith.select %40, %41, %42 : vector<1x8x128xi1>, vector<1x8x128xf32>
    %c0_13 = arith.constant 0 : index
    %c0_14 = arith.constant 0 : index
    %c0_15 = arith.constant 0 : index
    %44 = vector.load %arg3[%c0_13, %c0_14, %c0_15] : memref<1x8x128xf32, #tpu.memory_space<vmem>>, vector<1x8x128xf32>
    tpu.vector_store %arg3[%c0_13, %c0_14, %c0_15], %43 {strides = array<i32>} : memref<1x8x128xf32, #tpu.memory_space<vmem>>, vector<1x8x128xf32>,
    return
  }
  func.func @transform_0(%arg0: i32) -> (i32, i32) {
    %c0_i32 = arith.constant 0 : i32
    %c0_i32_0 = arith.constant 0 : i32
    return %arg0, %c0_i32 : i32, i32
  }
  func.func @transform_1(%arg0: i32) -> (i32, i32) {
    %c0_i32 = arith.constant 0 : i32
    %c0_i32_0 = arith.constant 0 : i32
    return %arg0, %c0_i32 : i32, i32
  }
  func.func @transform_2(%arg0: i32) -> (i32, i32, i32) {
    %c0_i32 = arith.constant 0 : i32
    %c0_i32_0 = arith.constant 0 : i32
    %c0_i32_1 = arith.constant 0 : i32
    return %arg0, %c0_i32, %c0_i32_0 : i32, i32, i32
  }
}

</mosaic_0001>

<llo_original>
// kernel: tpu_custom_call.1
$region0: #{tpu_custom_call.1}
  #allocation0 [shape = 'u32[]', space=smem, size = 0x4, offset = 0x4, fixed_abs, tag = 'smem constant byte address 0x4 - core index']
  #allocation1 [shape = 'u32[144,128]{1,0:T(1,128)}', space=vmem, size = 0x12000, scoped, tag = 'internal scratch']
  %s0 = inlined_call_operand.vmem [shape: f32[8,16], index: 0, kind: input, shape index: {}]
  %s1 = inlined_call_operand.vmem [shape: s32[8,1], index: 1, kind: input, shape index: {}]
  %s2 = inlined_call_operand.hbm [shape: f32[1,8,128], index: 2, kind: output, shape index: {}]
  %s3 = sld [smem:[#allocation0]]
  $region18: #{tpu_custom_call.1} parent=0
    _
  %s5 = ssub.s32 1, %s3
  %s6 = scalar_select 0, %s5, %s3
  $region1: #{tpu_custom_call.1} parent=0
    #allocation2 [shape = 'u8[4096]{0}', space=vmem, size = 0x1000, scoped, tag = 'output window, operand 0, single buffered']
    #allocation3 [shape = 's32[1]{0}', space=sflag, size = 0x4, scoped, tag = 'scoped memory for tpu_custom_call.1']
    %7 = vsyncpa [#allocation3], 0
    // Predicated region
    $region2: #{tpu_custom_call.1} parent=1 // pred_check
      _
    $region3: #{tpu_custom_call.1} parent=1 // pred_check_branch
      %9 = sbr.rel (0) target = $region5
    $region4: #{tpu_custom_call.1} parent=1 // pred_region
      _
    $region5: #{tpu_custom_call.1} parent=1 // pred_fallthru
      _
    // Predicated region
    $region6: #{tpu_custom_call.1} parent=1 // pred_check
      _
    $region7: #{tpu_custom_call.1} parent=1 // pred_check_branch
      %11 = sbr.rel (0) target = $region9
    $region8: #{tpu_custom_call.1} parent=1 // pred_region
      _
    $region9: #{tpu_custom_call.1} parent=1 // pred_fallthru
      _
    %v12 = vld [vmem:[%s0] sm:$0xff]
    %v13 = vld [vmem:[%s1] sm:$0xff]
    %vm14 = vcmask 130048
    %v15 = vsel %vm14, %v12, -inf
    %16 = vmax.xlane.f32.xlu0 %v15
    %v17 = vpop.xlane.xlu0 %16
    %v18 = vsub.f32 %v12, %v17
    %v19 = vmul.f32 %v18, 1.442695
    %v20 = vpow.pop %v19
    %v21 = vsel %vm14, %v20, 0.0
    %22 = vadd.xlane.f32.xlu0 %v21
    %v23 = vpop.xlane.xlu0 %22
    %v24 = vlog2.pop %v23
    %v25 = vmul.f32 %v24, 0.6931472
    %v26 = vadd.f32 %v17, %v25
    %v27 = vlaneseq
    %v28 = vand.u32 %v27, 127
    %29 = vset.pattern.permute.xlu0 0
    %30 = vperm.xlu0 %29, %v13
    %v31 = vpop.permute.xlu0 %30
    %vm32 = vcmp.eq.s32.totalorder %v28, %v31
    %v33 = vsel %vm32, %v12, 0.0
    %v34 = vsel %vm14, %v33, 0.0
    %35 = vadd.xlane.f32.xlu0 %v34
    %v36 = vpop.xlane.xlu0 %35
    %v37 = vsub.f32 %v26, %v36
    %v38 = vsub.f32 0.0, %v37
    %v39 = vmul.f32 %v38, 1.442695
    %v40 = vpow.pop %v39
    %v41 = vsub.f32 1.0, %v40
    %v42 = vmul.f32 %v41, %v41
    %v43 = vmul.f32 %v42, 0.25
    %v44 = vmul.f32 %v43, %v37
    %vm45 = vcmask 7168
    %v46 = vsel %vm45, %v44, 0.0
    %47 = vadd.xlane.f32.xlu0 %v46
    %v48 = vpop.xlane.xlu0 %47
    %v49 = vrot.slane %v48, 4
    %v50 = vadd.f32 %v48, %v49
    %v51 = vrot.slane %v50, 2
    %v52 = vadd.f32 %v50, %v51
    %v53 = vrot.slane %v52, 1
    %v54 = vadd.f32 %v52, %v53
    %s55 = vtos %v54
    %v56 = vlaneseq
    %v57 = vshrl.u32 %v56, 7
    %vm58 = vcmp.eq.s32.totalorder %v57, 0
    %vm59 = vcmp.eq.s32.totalorder %v28, 0
    %vm60 = vmand %vm58, %vm59
    %v61 = vstv %s55
    %v62 = vsel %vm60, %v61, 0.0
    %63 = vst [vmem:[#allocation2] sm:$0xff] %v62
    // Predicated region
    $region10: #{tpu_custom_call.1} parent=1 // pred_check
      _
    $region11: #{tpu_custom_call.1} parent=1 // pred_check_branch
      %65 = sbr.rel (0) target = $region13
    $region12: #{tpu_custom_call.1} parent=1 // pred_region
      %s67 = ssub.s32 128, 128
      %68 = vsyncadd [#allocation3], %s67
      %s70 = sshll.u32 [#allocation2], 4
      %s71 = int_to_ptr.vmem [resolvable:$true] %s70
      %73 = dma.vmem_to_hbm [thread:$0]  %s71, 128, %s2, [#allocation3]
    $region13: #{tpu_custom_call.1} parent=1 // pred_fallthru
      _
    // Predicated region
    $region14: #{tpu_custom_call.1} parent=1 // pred_check
      _
    $region15: #{tpu_custom_call.1} parent=1 // pred_check_branch
      %75 = sbr.rel (0) target = $region17
    $region16: #{tpu_custom_call.1} parent=1 // pred_region
      %76 = dma.done [#allocation3], 128
    $region17: #{tpu_custom_call.1} parent=1 // pred_fallthru
      _
    %77 = vsyncpa [#allocation3], 1

</llo_original>
